<compile_context>
chip_gen: v6e
topology: v6e:2x2x1
jax: 0.10.0
libtpu: 0.0.40
codegen_flags: <defaults>
</compile_context>

<pallas_src>
import functools

import jax
import jax.numpy as jnp
from jax.experimental import pallas as pl
from jax.experimental.pallas import tpu as pltpu

BN_EPS = 1e-5
_MAX_TILE = 2048  # rows per batch tile (few MiB working set, well under scoped VMEM)

_COMPILER_PARAMS = pltpu.CompilerParams(
    dimension_semantics=("parallel",),
    vmem_limit_bytes=32 * 1024 * 1024,
)


# --------------------------------------------------------------------------- #
# Kernels
# --------------------------------------------------------------------------- #
def _one_hot_bf16(op_i):
    """(tb, 6) int32 operator indices -> (tb, 32) bf16 one-hot (lanes 30/31 stay 0)."""
    lane = jax.lax.broadcasted_iota(jnp.int32, (1, 32), 1)      # lanes 0..31
    hit = lane == op_i[:, 0:1]                                   # group 0 -> lanes 0..4
    for j in range(1, 6):                                        # group j -> lanes 5j..5j+4
        hit = hit | (lane == (5 * j + op_i[:, j : j + 1]))
    return hit.astype(jnp.bfloat16)                              # (tb, 32)


def _h1_pre(op_ref, lap_ref, wf_ref, vec_ref):
    """Pre-BN linear1 activations (tb, 200) f32, recomputed from raw inputs."""
    f32 = jnp.float32
    oh = _one_hot_bf16(op_ref[...])
    w_emb = wf_ref[0:32, :]                                      # folded embedding path
    w_lap = wf_ref[32:48, :]                                     # folded laplace path
    b_fold = vec_ref[:, 0:200]
    return (jnp.dot(oh, w_emb, preferred_element_type=f32)
            + jnp.dot(lap_ref[...], w_lap, preferred_element_type=f32)
            + b_fold)


def stage1_kernel(op_ref, lap_ref, wf_ref, vec_ref, st_ref, *, b_real):
    """Folded (embedding + transform + linear1); emit masked BN1 partial sums."""
    tb = op_ref.shape[0]
    h1 = _h1_pre(op_ref, lap_ref, wf_ref, vec_ref)               # (tb, 200) f32

    row = jax.lax.broadcasted_iota(jnp.int32, (tb, 1), 0) + pl.program_id(0) * tb
    valid = (row < b_real).astype(jnp.float32)
    s = jnp.sum(h1 * valid, axis=0, keepdims=True)               # (1, 200)
    q = jnp.sum(h1 * h1 * valid, axis=0, keepdims=True)          # (1, 200)
    rid = jax.lax.broadcasted_iota(jnp.int32, st_ref.shape, 1)   # (1, 2, 200)
    st_ref[...] = jnp.where(rid == 0, s[None], q[None])


def stage2_kernel(op_ref, lap_ref, wf_ref, w2_ref, vec_ref, st_ref, h2_ref, *, b_real):
    """In-kernel BN1 finalize + recomputed h1 + BN1 + ReLU + linear2 -> h2 (pre-BN2)."""
    f32, bf16 = jnp.float32, jnp.bfloat16

    # ---- finalize batch-wide BN1 statistics (tiny (2,200) reduction) --------
    st = jnp.sum(st_ref[...], axis=0)                            # (2, 200)
    inv_b = f32(1.0 / b_real)
    mean1 = st[0:1, :] * inv_b
    var1 = jnp.maximum(st[1:2, :] * inv_b - mean1 * mean1, 0.0)
    g1 = vec_ref[:, 256:456]
    be1 = vec_ref[:, 512:712]
    scale1 = g1 * jax.lax.rsqrt(var1 + BN_EPS)
    shift1 = be1 - mean1 * scale1

    # ---- recompute h1 (cheaper than an HBM round trip), BN1 + ReLU ----------
    h1 = _h1_pre(op_ref, lap_ref, wf_ref, vec_ref)               # (tb, 200) f32
    a1 = jnp.maximum(h1 * scale1 + shift1, 0.0)

    # ---- linear2 (200 -> 16), pre-BN2 ---------------------------------------
    b2 = vec_ref[:, 768:784]
    h2_ref[...] = jnp.dot(a1.astype(bf16), w2_ref[...], preferred_element_type=f32) + b2


# --------------------------------------------------------------------------- #
# Parameters (PyTorch-equivalent init) and one-time preprocessing
# --------------------------------------------------------------------------- #
def make_params(key):
    ks = jax.random.split(key, 10)
    u = lambda k, shape, s: (jax.random.uniform(k, shape, jnp.float32) * 2.0 - 1.0) * s
    return {
        "emb": u(ks[0], (5, 80), 1.0),            # nn.Embedding(5, 80)
        "wt": u(ks[1], (16, 480), 0.25),          # nn.Linear(16, 480)   (in, out)
        "bt": u(ks[2], (1, 480), 0.25),
        "w1": u(ks[3], (480, 200), 0.045),        # nn.Linear(480, 200)
        "b1": u(ks[4], (1, 200), 0.045),
        "w2": u(ks[5], (200, 16), 0.07),          # nn.Linear(200, 16)
        "b2": u(ks[6], (1, 16), 0.07),
        "w3": u(ks[7], (16, 1), 0.25),            # nn.Linear(16, 1)
        "b3": u(ks[8], (1, 1), 0.25),
        "g1": jnp.ones((1, 200), jnp.float32),    # bn1 weight / bias (PyTorch defaults)
        "be1": jnp.zeros((1, 200), jnp.float32),
        "g2": jnp.ones((1, 16), jnp.float32),     # bn2 weight / bias
        "be2": jnp.zeros((1, 16), jnp.float32),
    }


def prepare_params(params):
    """Fold the affine prefix (embedding/transform/linear1) offline; pack vectors."""
    f32, bf16 = jnp.float32, jnp.bfloat16
    emb = params["emb"].astype(f32)                               # (5, 80)
    eblk = jnp.kron(jnp.eye(6, dtype=f32), emb)                   # (30, 480) block-diagonal
    w1 = params["w1"].astype(f32)                                 # (480, 200)

    w_emb_fold = eblk @ w1                                        # (30, 200), fold in f32
    w_lap_fold = params["wt"].astype(f32) @ w1                    # (16, 200)
    b_fold = params["bt"].astype(f32) @ w1 + params["b1"]         # (1, 200)

    wfold = jnp.zeros((48, 200), f32)                             # rows 30..31 zero padding
    wfold = wfold.at[0:30].set(w_emb_fold).at[32:48].set(w_lap_fold)

    # per-stage vectors in one 128-lane-aligned f32 slab
    vec = jnp.zeros((1, 1024), f32)
    vec = (vec.at[0, 0:200].set(b_fold.reshape(-1))
              .at[0, 256:456].set(params["g1"].reshape(-1))
              .at[0, 512:712].set(params["be1"].reshape(-1))
              .at[0, 768:784].set(params["b2"].reshape(-1)))

    return {
        "wfold": wfold.astype(bf16),                              # single bf16 cast
        "w2": params["w2"].astype(bf16),
        "vec": vec,
        "g2": params["g2"], "be2": params["be2"],
        "w3": params["w3"], "b3": params["b3"],
    }


# --------------------------------------------------------------------------- #
# Forward
# --------------------------------------------------------------------------- #
def _round_up(x, m):
    return (x + m - 1) // m * m


@jax.jit
def mlp_embedding(laplace, operator, prep):
    B = laplace.shape[0]

    # batch tiling: fat tiles, but keep >= 2 tiles when possible so a v7x
    # megacore can split the "parallel" grid axis across both TensorCores.
    if B <= 16:
        TB, G = B, 1
    else:
        TB = min(_MAX_TILE, _round_up(-(-B // 2), 8))
        G = -(-B // TB)
    Bp = G * TB

    lap = laplace.astype(jnp.bfloat16)
    op = operator.astype(jnp.int32)
    pad = Bp - B
    if pad:
        lap = jnp.pad(lap, ((0, pad), (0, 0)))
        op = jnp.pad(op, ((0, pad), (0, 0)))      # index 0 is valid; stats are masked

    wf, w2, vec = prep["wfold"], prep["w2"], prep["vec"]

    # ------------- stage 1: folded prefix -> BN1 partial statistics ----------
    st1 = pl.pallas_call(
        functools.partial(stage1_kernel, b_real=B),
        grid=(G,),
        in_specs=[
            pl.BlockSpec((TB, 6), lambda i: (i, 0)),
            pl.BlockSpec((TB, 16), lambda i: (i, 0)),
            pl.BlockSpec((48, 200), lambda i: (0, 0)),
            pl.BlockSpec((1, 1024), lambda i: (0, 0)),
        ],
        out_specs=pl.BlockSpec((1, 2, 200), lambda i: (i, 0, 0)),
        out_shape=jax.ShapeDtypeStruct((G, 2, 200), jnp.float32),
        compiler_params=_COMPILER_PARAMS,
    )(op, lap, wf, vec)

    # ------------- stage 2: BN1 finalize + recompute h1 + ReLU + linear2 -----
    h2 = pl.pallas_call(
        functools.partial(stage2_kernel, b_real=B),
        grid=(G,),
        in_specs=[
            pl.BlockSpec((TB, 6), lambda i: (i, 0)),
            pl.BlockSpec((TB, 16), lambda i: (i, 0)),
            pl.BlockSpec((48, 200), lambda i: (0, 0)),
            pl.BlockSpec((200, 16), lambda i: (0, 0)),
            pl.BlockSpec((1, 1024), lambda i: (0, 0)),
            pl.BlockSpec((G, 2, 200), lambda i: (0, 0, 0)),
        ],
        out_specs=pl.BlockSpec((TB, 16), lambda i: (i, 0)),
        out_shape=jax.ShapeDtypeStruct((Bp, 16), jnp.float32),
        compiler_params=_COMPILER_PARAMS,
    )(op, lap, wf, w2, vec, st1)

    # ------------- tail: BN2 + ReLU + linear3 + sigmoid (tiny, plain XLA) ----
    h2 = h2[:B]
    m2 = jnp.mean(h2, axis=0, keepdims=True)
    v2 = jnp.mean(jnp.square(h2 - m2), axis=0, keepdims=True)     # biased (training) var
    a2 = jnp.maximum((h2 - m2) * jax.lax.rsqrt(v2 + BN_EPS) * prep["g2"] + prep["be2"], 0.0)
    return jax.nn.sigmoid(a2 @ prep["w3"] + prep["b3"])


# --------------------------------------------------------------------------- #
# Pure-JAX reference (f32, training-mode BN) and test
# --------------------------------------------------------------------------- #
def mlp_embedding_ref(laplace, operator, params):
    B = laplace.shape[0]
    x1 = params["emb"][operator]                                   # (B, 6, 80)
    x2 = laplace @ params["wt"] + params["bt"]                     # (B, 480)
    x = (x1 + x2.reshape(B, 6, 80)).reshape(B, 480)

    def bn(h, g, b):
        m = jnp.mean(h, axis=0, keepdims=True)
        v = jnp.mean((h - m) ** 2, axis=0, keepdims=True)
        return (h - m) / jnp.sqrt(v + BN_EPS) * g + b

    h1 = jnp.maximum(bn(x @ params["w1"] + params["b1"], params["g1"], params["be1"]), 0.0)
    h2 = jnp.maximum(bn(h1 @ params["w2"] + params["b2"], params["g2"], params["be2"]), 0.0)
    return jax.nn.sigmoid(h2 @ params["w3"] + params["b3"])


if __name__ == "__main__":
    key = jax.random.PRNGKey(0)
    k_param, k_lap, k_op = jax.random.split(key, 3)

    params = make_params(k_param)
    prep = prepare_params(params)

    # small single-tile case (B=8) and a multi-tile / padded case (B=24, G=2)
    for B in (8, 24):
        k_l, k_o = jax.random.fold_in(k_lap, B), jax.random.fold_in(k_op, B)
        laplace = jax.random.normal(k_l, (B, 16), jnp.float32)
        operator = jax.random.randint(k_o, (B, 6), 0, 5, jnp.int32)

        out = jax.block_until_ready(mlp_embedding(laplace, operator, prep))
        ref = mlp_embedding_ref(laplace, operator, params)
        assert out.shape == (B, 1)
        # bf16 matmuls with f32 accumulation -> slightly looser tolerance than pure f32.
        assert jnp.allclose(out, ref, rtol=3e-2, atol=3e-2), (B, out, ref)

    print("KERNEL_OK")
</pallas_src>

<mosaic_0001>
module attributes {stable_mosaic.version = 11 : i64} {
  func.func @stage1_kernel(%arg0: i32, %arg1: memref<8x6xi32, #tpu.memory_space<vmem>>, %arg2: memref<8x16xbf16, #tpu.memory_space<vmem>>, %arg3: memref<48x200xbf16, #tpu.memory_space<vmem>>, %arg4: memref<1x1024xf32, #tpu.memory_space<vmem>>, %arg5: memref<1x2x200xf32, #tpu.memory_space<vmem>>) attributes {dimension_semantics = [#tpu.dimension_semantics<parallel>], iteration_bounds = array<i64: 1>, scalar_prefetch = 0 : i64, scratch_operands = 0 : i64, tpu.core_type = #tpu.core_type<tc>, window_params = [{transform_indices = @transform_0, window_bounds = array<i64: 8, 6>}, {transform_indices = @transform_1, window_bounds = array<i64: 8, 16>}, {pipeline_mode = #tpu.pipeline_mode<synchronous>, transform_indices = @transform_2, window_bounds = array<i64: 48, 200>}, {pipeline_mode = #tpu.pipeline_mode<synchronous>, transform_indices = @transform_3, window_bounds = array<i64: 1, 1024>}, {transform_indices = @transform_4, window_bounds = array<i64: 1, 2, 200>}]} {
    %c0 = arith.constant 0 : index
    %c0_0 = arith.constant 0 : index
    %0 = vector.load %arg1[%c0, %c0_0] : memref<8x6xi32, #tpu.memory_space<vmem>>, vector<8x6xi32>
    %1 = tpu.iota {dimensions = array<i32: 1>} : vector<1x32xi32>
    %2 = vector.extract_strided_slice %0 {offsets = [0, 0], sizes = [8, 1], strides = [1, 1]} : vector<8x6xi32> to vector<8x1xi32>
    %3 = vector.broadcast %1 : vector<1x32xi32> to vector<8x32xi32>
    %4 = vector.broadcast %2 : vector<8x1xi32> to vector<8x32xi32>
    %5 = arith.cmpi eq, %3, %4 : vector<8x32xi32>
    %6 = vector.extract_strided_slice %0 {offsets = [0, 1], sizes = [8, 1], strides = [1, 1]} : vector<8x6xi32> to vector<8x1xi32>
    %c5_i32 = arith.constant 5 : i32
    %7 = vector.broadcast %c5_i32 : i32 to vector<8x1xi32>
    %8 = arith.addi %7, %6 : vector<8x1xi32>
    %9 = vector.broadcast %1 : vector<1x32xi32> to vector<8x32xi32>
    %10 = vector.broadcast %8 : vector<8x1xi32> to vector<8x32xi32>
    %11 = arith.cmpi eq, %9, %10 : vector<8x32xi32>
    %12 = arith.ori %5, %11 : vector<8x32xi1>
    %13 = vector.extract_strided_slice %0 {offsets = [0, 2], sizes = [8, 1], strides = [1, 1]} : vector<8x6xi32> to vector<8x1xi32>
    %c10_i32 = arith.constant 10 : i32
    %14 = vector.broadcast %c10_i32 : i32 to vector<8x1xi32>
    %15 = arith.addi %14, %13 : vector<8x1xi32>
    %16 = vector.broadcast %1 : vector<1x32xi32> to vector<8x32xi32>
    %17 = vector.broadcast %15 : vector<8x1xi32> to vector<8x32xi32>
    %18 = arith.cmpi eq, %16, %17 : vector<8x32xi32>
    %19 = arith.ori %12, %18 : vector<8x32xi1>
    %20 = vector.extract_strided_slice %0 {offsets = [0, 3], sizes = [8, 1], strides = [1, 1]} : vector<8x6xi32> to vector<8x1xi32>
    %c15_i32 = arith.constant 15 : i32
    %21 = vector.broadcast %c15_i32 : i32 to vector<8x1xi32>
    %22 = arith.addi %21, %20 : vector<8x1xi32>
    %23 = vector.broadcast %1 : vector<1x32xi32> to vector<8x32xi32>
    %24 = vector.broadcast %22 : vector<8x1xi32> to vector<8x32xi32>
    %25 = arith.cmpi eq, %23, %24 : vector<8x32xi32>
    %26 = arith.ori %19, %25 : vector<8x32xi1>
    %27 = vector.extract_strided_slice %0 {offsets = [0, 4], sizes = [8, 1], strides = [1, 1]} : vector<8x6xi32> to vector<8x1xi32>
    %c20_i32 = arith.constant 20 : i32
    %28 = vector.broadcast %c20_i32 : i32 to vector<8x1xi32>
    %29 = arith.addi %28, %27 : vector<8x1xi32>
    %30 = vector.broadcast %1 : vector<1x32xi32> to vector<8x32xi32>
    %31 = vector.broadcast %29 : vector<8x1xi32> to vector<8x32xi32>
    %32 = arith.cmpi eq, %30, %31 : vector<8x32xi32>
    %33 = arith.ori %26, %32 : vector<8x32xi1>
    %34 = vector.extract_strided_slice %0 {offsets = [0, 5], sizes = [8, 1], strides = [1, 1]} : vector<8x6xi32> to vector<8x1xi32>
    %c25_i32 = arith.constant 25 : i32
    %35 = vector.broadcast %c25_i32 : i32 to vector<8x1xi32>
    %36 = arith.addi %35, %34 : vector<8x1xi32>
    %37 = vector.broadcast %1 : vector<1x32xi32> to vector<8x32xi32>
    %38 = vector.broadcast %36 : vector<8x1xi32> to vector<8x32xi32>
    %39 = arith.cmpi eq, %37, %38 : vector<8x32xi32>
    %40 = arith.ori %33, %39 : vector<8x32xi1>
    %41 = arith.extui %40 : vector<8x32xi1> to vector<8x32xi32>
    %42 = arith.sitofp %41 : vector<8x32xi32> to vector<8x32xf32>
    %43 = arith.truncf %42 : vector<8x32xf32> to vector<8x32xbf16>
    %c0_1 = arith.constant 0 : index
    %c0_2 = arith.constant 0 : index
    %44 = vector.load %arg3[%c0_1, %c0_2] : memref<48x200xbf16, #tpu.memory_space<vmem>>, vector<32x200xbf16>
    %c32 = arith.constant 32 : index
    %c0_3 = arith.constant 0 : index
    %45 = vector.load %arg3[%c32, %c0_3] : memref<48x200xbf16, #tpu.memory_space<vmem>>, vector<16x200xbf16>
    %c0_4 = arith.constant 0 : index
    %c0_5 = arith.constant 0 : index
    %46 = vector.load %arg4[%c0_4, %c0_5] : memref<1x1024xf32, #tpu.memory_space<vmem>>, vector<1x200xf32>
    %cst = arith.constant dense<0.000000e+00> : vector<8x200xf32>
    %47 = tpu.matmul %43, %44, %cst {dimension_numbers = #tpu.dot_dimension_numbers<[1], [0], [0], [1], [0, 0, 1, 1], [], []>} : vector<8x32xbf16>, vector<32x200xbf16>, vector<8x200xf32> -> vector<8x200xf32>
    %c0_6 = arith.constant 0 : index
    %c0_7 = arith.constant 0 : index
    %48 = vector.load %arg2[%c0_6, %c0_7] : memref<8x16xbf16, #tpu.memory_space<vmem>>, vector<8x16xbf16>
    %cst_8 = arith.constant dense<0.000000e+00> : vector<8x200xf32>
    %49 = tpu.matmul %48, %45, %cst_8 {dimension_numbers = #tpu.dot_dimension_numbers<[1], [0], [0], [1], [0, 0, 1, 1], [], []>} : vector<8x16xbf16>, vector<16x200xbf16>, vector<8x200xf32> -> vector<8x200xf32>
    %50 = arith.addf %47, %49 : vector<8x200xf32>
    %51 = vector.broadcast %46 : vector<1x200xf32> to vector<8x200xf32>
    %52 = arith.addf %50, %51 : vector<8x200xf32>
    %53 = tpu.iota {dimensions = array<i32: 0>} : vector<8x1xi32>
    %c8_i32 = arith.constant 8 : i32
    %54 = arith.muli %arg0, %c8_i32 : i32
    %55 = vector.broadcast %54 : i32 to vector<8x1xi32>
    %56 = arith.addi %53, %55 : vector<8x1xi32>
    %c8_i32_9 = arith.constant 8 : i32
    %57 = vector.broadcast %c8_i32_9 : i32 to vector<8x1xi32>
    %58 = arith.cmpi slt, %56, %57 : vector<8x1xi32>
    %59 = arith.extui %58 : vector<8x1xi1> to vector<8x1xi32>
    %60 = arith.sitofp %59 : vector<8x1xi32> to vector<8x1xf32>
    %61 = vector.broadcast %60 : vector<8x1xf32> to vector<8x200xf32>
    %62 = arith.mulf %52, %61 : vector<8x200xf32>
    %cst_10 = arith.constant dense<0.000000e+00> : vector<200xf32>
    %63 = vector.multi_reduction <add>, %62, %cst_10 [0] : vector<8x200xf32> to vector<200xf32>
    %64 = vector.shape_cast %63 : vector<200xf32> to vector<1x200xf32>
    %65 = arith.mulf %52, %52 : vector<8x200xf32>
    %66 = vector.broadcast %60 : vector<8x1xf32> to vector<8x200xf32>
    %67 = arith.mulf %65, %66 : vector<8x200xf32>
    %cst_11 = arith.constant dense<0.000000e+00> : vector<200xf32>
    %68 = vector.multi_reduction <add>, %67, %cst_11 [0] : vector<8x200xf32> to vector<200xf32>
    %69 = vector.shape_cast %68 : vector<200xf32> to vector<1x200xf32>
    %70 = tpu.iota {dimensions = array<i32: 1>} : vector<1x2x200xi32>
    %c0_i32 = arith.constant 0 : i32
    %71 = vector.broadcast %c0_i32 : i32 to vector<1x2x200xi32>
    %72 = arith.cmpi eq, %70, %71 : vector<1x2x200xi32>
    %73 = vector.shape_cast %64 : vector<1x200xf32> to vector<1x1x200xf32>
    %74 = vector.shape_cast %69 : vector<1x200xf32> to vector<1x1x200xf32>
    %75 = vector.shape_cast %73 : vector<1x1x200xf32> to vector<1x1x200xf32>
    %76 = vector.broadcast %75 : vector<1x1x200xf32> to vector<1x2x200xf32>
    %77 = vector.shape_cast %74 : vector<1x1x200xf32> to vector<1x1x200xf32>
    %78 = vector.broadcast %77 : vector<1x1x200xf32> to vector<1x2x200xf32>
    %79 = arith.select %72, %76, %78 : vector<1x2x200xi1>, vector<1x2x200xf32>
    %c0_12 = arith.constant 0 : index
    %c0_13 = arith.constant 0 : index
    %c0_14 = arith.constant 0 : index
    %80 = vector.load %arg5[%c0_12, %c0_13, %c0_14] : memref<1x2x200xf32, #tpu.memory_space<vmem>>, vector<1x2x200xf32>
    tpu.vector_store %arg5[%c0_12, %c0_13, %c0_14], %79 {strides = array<i32>} : memref<1x2x200xf32, #tpu.memory_space<vmem>>, vector<1x2x200xf32>,
    return
  }
  func.func @transform_0(%arg0: i32) -> (i32, i32) {
    %c0_i32 = arith.constant 0 : i32
    %c0_i32_0 = arith.constant 0 : i32
    return %arg0, %c0_i32 : i32, i32
  }
  func.func @transform_1(%arg0: i32) -> (i32, i32) {
    %c0_i32 = arith.constant 0 : i32
    %c0_i32_0 = arith.constant 0 : i32
    return %arg0, %c0_i32 : i32, i32
  }
  func.func @transform_2(%arg0: i32) -> (i32, i32) {
    %c0_i32 = arith.constant 0 : i32
    %c0_i32_0 = arith.constant 0 : i32
    %c0_i32_1 = arith.constant 0 : i32
    return %c0_i32, %c0_i32_0 : i32, i32
  }
  func.func @transform_3(%arg0: i32) -> (i32, i32) {
    %c0_i32 = arith.constant 0 : i32
    %c0_i32_0 = arith.constant 0 : i32
    %c0_i32_1 = arith.constant 0 : i32
    return %c0_i32, %c0_i32_0 : i32, i32
  }
  func.func @transform_4(%arg0: i32) -> (i32, i32, i32) {
    %c0_i32 = arith.constant 0 : i32
    %c0_i32_0 = arith.constant 0 : i32
    %c0_i32_1 = arith.constant 0 : i32
    return %arg0, %c0_i32, %c0_i32_0 : i32, i32, i32
  }
}

module attributes {stable_mosaic.version = 11 : i64} {
  func.func @stage2_kernel(%arg0: i32, %arg1: memref<8x6xi32, #tpu.memory_space<vmem>>, %arg2: memref<8x16xbf16, #tpu.memory_space<vmem>>, %arg3: memref<48x200xbf16, #tpu.memory_space<vmem>>, %arg4: memref<200x16xbf16, #tpu.memory_space<vmem>>, %arg5: memref<1x1024xf32, #tpu.memory_space<vmem>>, %arg6: memref<1x2x200xf32, #tpu.memory_space<vmem>>, %arg7: memref<8x16xf32, #tpu.memory_space<vmem>>) attributes {dimension_semantics = [#tpu.dimension_semantics<parallel>], iteration_bounds = array<i64: 1>, scalar_prefetch = 0 : i64, scratch_operands = 0 : i64, tpu.core_type = #tpu.core_type<tc>, window_params = [{transform_indices = @transform_0, window_bounds = array<i64: 8, 6>}, {transform_indices = @transform_1, window_bounds = array<i64: 8, 16>}, {pipeline_mode = #tpu.pipeline_mode<synchronous>, transform_indices = @transform_2, window_bounds = array<i64: 48, 200>}, {pipeline_mode = #tpu.pipeline_mode<synchronous>, transform_indices = @transform_3, window_bounds = array<i64: 200, 16>}, {pipeline_mode = #tpu.pipeline_mode<synchronous>, transform_indices = @transform_4, window_bounds = array<i64: 1, 1024>}, {pipeline_mode = #tpu.pipeline_mode<synchronous>, transform_indices = @transform_5, window_bounds = array<i64: 1, 2, 200>}, {transform_indices = @transform_6, window_bounds = array<i64: 8, 16>}]} {
    %c0 = arith.constant 0 : index
    %c0_0 = arith.constant 0 : index
    %c0_1 = arith.constant 0 : index
    %0 = vector.load %arg6[%c0, %c0_0, %c0_1] : memref<1x2x200xf32, #tpu.memory_space<vmem>>, vector<1x2x200xf32>
    %cst = arith.constant dense<0.000000e+00> : vector<2x200xf32>
    %1 = vector.multi_reduction <add>, %0, %cst [0] : vector<1x2x200xf32> to vector<2x200xf32>
    %2 = vector.extract_strided_slice %1 {offsets = [0, 0], sizes = [1, 200], strides = [1, 1]} : vector<2x200xf32> to vector<1x200xf32>
    %cst_2 = arith.constant 1.250000e-01 : f32
    %3 = vector.broadcast %cst_2 : f32 to vector<1x200xf32>
    %4 = arith.mulf %2, %3 : vector<1x200xf32>
    %5 = vector.extract_strided_slice %1 {offsets = [1, 0], sizes = [1, 200], strides = [1, 1]} : vector<2x200xf32> to vector<1x200xf32>
    %cst_3 = arith.constant 1.250000e-01 : f32
    %6 = vector.broadcast %cst_3 : f32 to vector<1x200xf32>
    %7 = arith.mulf %5, %6 : vector<1x200xf32>
    %8 = arith.mulf %4, %4 : vector<1x200xf32>
    %9 = arith.subf %7, %8 : vector<1x200xf32>
    %cst_4 = arith.constant 0.000000e+00 : f32
    %10 = vector.broadcast %cst_4 : f32 to vector<1x200xf32>
    %11 = arith.maximumf %9, %10 : vector<1x200xf32>
    %c0_5 = arith.constant 0 : index
    %c256 = arith.constant 256 : index
    %12 = vector.load %arg5[%c0_5, %c256] : memref<1x1024xf32, #tpu.memory_space<vmem>>, vector<1x200xf32>
    %c0_6 = arith.constant 0 : index
    %c512 = arith.constant 512 : index
    %13 = vector.load %arg5[%c0_6, %c512] : memref<1x1024xf32, #tpu.memory_space<vmem>>, vector<1x200xf32>
    %cst_7 = arith.constant 9.99999974E-6 : f32
    %14 = vector.broadcast %cst_7 : f32 to vector<1x200xf32>
    %15 = arith.addf %11, %14 : vector<1x200xf32>
    %16 = math.rsqrt %15 : vector<1x200xf32>
    %17 = arith.mulf %12, %16 : vector<1x200xf32>
    %18 = arith.mulf %4, %17 : vector<1x200xf32>
    %19 = arith.subf %13, %18 : vector<1x200xf32>
    %c0_8 = arith.constant 0 : index
    %c0_9 = arith.constant 0 : index
    %20 = vector.load %arg1[%c0_8, %c0_9] : memref<8x6xi32, #tpu.memory_space<vmem>>, vector<8x6xi32>
    %21 = tpu.iota {dimensions = array<i32: 1>} : vector<1x32xi32>
    %22 = vector.extract_strided_slice %20 {offsets = [0, 0], sizes = [8, 1], strides = [1, 1]} : vector<8x6xi32> to vector<8x1xi32>
    %23 = vector.broadcast %21 : vector<1x32xi32> to vector<8x32xi32>
    %24 = vector.broadcast %22 : vector<8x1xi32> to vector<8x32xi32>
    %25 = arith.cmpi eq, %23, %24 : vector<8x32xi32>
    %26 = vector.extract_strided_slice %20 {offsets = [0, 1], sizes = [8, 1], strides = [1, 1]} : vector<8x6xi32> to vector<8x1xi32>
    %c5_i32 = arith.constant 5 : i32
    %27 = vector.broadcast %c5_i32 : i32 to vector<8x1xi32>
    %28 = arith.addi %27, %26 : vector<8x1xi32>
    %29 = vector.broadcast %21 : vector<1x32xi32> to vector<8x32xi32>
    %30 = vector.broadcast %28 : vector<8x1xi32> to vector<8x32xi32>
    %31 = arith.cmpi eq, %29, %30 : vector<8x32xi32>
    %32 = arith.ori %25, %31 : vector<8x32xi1>
    %33 = vector.extract_strided_slice %20 {offsets = [0, 2], sizes = [8, 1], strides = [1, 1]} : vector<8x6xi32> to vector<8x1xi32>
    %c10_i32 = arith.constant 10 : i32
    %34 = vector.broadcast %c10_i32 : i32 to vector<8x1xi32>
    %35 = arith.addi %34, %33 : vector<8x1xi32>
    %36 = vector.broadcast %21 : vector<1x32xi32> to vector<8x32xi32>
    %37 = vector.broadcast %35 : vector<8x1xi32> to vector<8x32xi32>
    %38 = arith.cmpi eq, %36, %37 : vector<8x32xi32>
    %39 = arith.ori %32, %38 : vector<8x32xi1>
    %40 = vector.extract_strided_slice %20 {offsets = [0, 3], sizes = [8, 1], strides = [1, 1]} : vector<8x6xi32> to vector<8x1xi32>
    %c15_i32 = arith.constant 15 : i32
    %41 = vector.broadcast %c15_i32 : i32 to vector<8x1xi32>
    %42 = arith.addi %41, %40 : vector<8x1xi32>
    %43 = vector.broadcast %21 : vector<1x32xi32> to vector<8x32xi32>
    %44 = vector.broadcast %42 : vector<8x1xi32> to vector<8x32xi32>
    %45 = arith.cmpi eq, %43, %44 : vector<8x32xi32>
    %46 = arith.ori %39, %45 : vector<8x32xi1>
    %47 = vector.extract_strided_slice %20 {offsets = [0, 4], sizes = [8, 1], strides = [1, 1]} : vector<8x6xi32> to vector<8x1xi32>
    %c20_i32 = arith.constant 20 : i32
    %48 = vector.broadcast %c20_i32 : i32 to vector<8x1xi32>
    %49 = arith.addi %48, %47 : vector<8x1xi32>
    %50 = vector.broadcast %21 : vector<1x32xi32> to vector<8x32xi32>
    %51 = vector.broadcast %49 : vector<8x1xi32> to vector<8x32xi32>
    %52 = arith.cmpi eq, %50, %51 : vector<8x32xi32>
    %53 = arith.ori %46, %52 : vector<8x32xi1>
    %54 = vector.extract_strided_slice %20 {offsets = [0, 5], sizes = [8, 1], strides = [1, 1]} : vector<8x6xi32> to vector<8x1xi32>
    %c25_i32 = arith.constant 25 : i32
    %55 = vector.broadcast %c25_i32 : i32 to vector<8x1xi32>
    %56 = arith.addi %55, %54 : vector<8x1xi32>
    %57 = vector.broadcast %21 : vector<1x32xi32> to vector<8x32xi32>
    %58 = vector.broadcast %56 : vector<8x1xi32> to vector<8x32xi32>
    %59 = arith.cmpi eq, %57, %58 : vector<8x32xi32>
    %60 = arith.ori %53, %59 : vector<8x32xi1>
    %61 = arith.extui %60 : vector<8x32xi1> to vector<8x32xi32>
    %62 = arith.sitofp %61 : vector<8x32xi32> to vector<8x32xf32>
    %63 = arith.truncf %62 : vector<8x32xf32> to vector<8x32xbf16>
    %c0_10 = arith.constant 0 : index
    %c0_11 = arith.constant 0 : index
    %64 = vector.load %arg3[%c0_10, %c0_11] : memref<48x200xbf16, #tpu.memory_space<vmem>>, vector<32x200xbf16>
    %c32 = arith.constant 32 : index
    %c0_12 = arith.constant 0 : index
    %65 = vector.load %arg3[%c32, %c0_12] : memref<48x200xbf16, #tpu.memory_space<vmem>>, vector<16x200xbf16>
    %c0_13 = arith.constant 0 : index
    %c0_14 = arith.constant 0 : index
    %66 = vector.load %arg5[%c0_13, %c0_14] : memref<1x1024xf32, #tpu.memory_space<vmem>>, vector<1x200xf32>
    %cst_15 = arith.constant dense<0.000000e+00> : vector<8x200xf32>
    %67 = tpu.matmul %63, %64, %cst_15 {dimension_numbers = #tpu.dot_dimension_numbers<[1], [0], [0], [1], [0, 0, 1, 1], [], []>} : vector<8x32xbf16>, vector<32x200xbf16>, vector<8x200xf32> -> vector<8x200xf32>
    %c0_16 = arith.constant 0 : index
    %c0_17 = arith.constant 0 : index
    %68 = vector.load %arg2[%c0_16, %c0_17] : memref<8x16xbf16, #tpu.memory_space<vmem>>, vector<8x16xbf16>
    %cst_18 = arith.constant dense<0.000000e+00> : vector<8x200xf32>
    %69 = tpu.matmul %68, %65, %cst_18 {dimension_numbers = #tpu.dot_dimension_numbers<[1], [0], [0], [1], [0, 0, 1, 1], [], []>} : vector<8x16xbf16>, vector<16x200xbf16>, vector<8x200xf32> -> vector<8x200xf32>
    %70 = arith.addf %67, %69 : vector<8x200xf32>
    %71 = vector.broadcast %66 : vector<1x200xf32> to vector<8x200xf32>
    %72 = arith.addf %70, %71 : vector<8x200xf32>
    %73 = vector.broadcast %17 : vector<1x200xf32> to vector<8x200xf32>
    %74 = arith.mulf %72, %73 : vector<8x200xf32>
    %75 = vector.broadcast %19 : vector<1x200xf32> to vector<8x200xf32>
    %76 = arith.addf %74, %75 : vector<8x200xf32>
    %cst_19 = arith.constant 0.000000e+00 : f32
    %77 = vector.broadcast %cst_19 : f32 to vector<8x200xf32>
    %78 = arith.maximumf %76, %77 : vector<8x200xf32>
    %c0_20 = arith.constant 0 : index
    %c768 = arith.constant 768 : index
    %79 = vector.load %arg5[%c0_20, %c768] : memref<1x1024xf32, #tpu.memory_space<vmem>>, vector<1x16xf32>
    %80 = arith.truncf %78 : vector<8x200xf32> to vector<8x200xbf16>
    %c0_21 = arith.constant 0 : index
    %c0_22 = arith.constant 0 : index
    %81 = vector.load %arg4[%c0_21, %c0_22] : memref<200x16xbf16, #tpu.memory_space<vmem>>, vector<200x16xbf16>
    %cst_23 = arith.constant dense<0.000000e+00> : vector<8x16xf32>
    %82 = tpu.matmul %80, %81, %cst_23 {dimension_numbers = #tpu.dot_dimension_numbers<[1], [0], [0], [1], [0, 0, 1, 1], [], []>} : vector<8x200xbf16>, vector<200x16xbf16>, vector<8x16xf32> -> vector<8x16xf32>
    %83 = vector.broadcast %79 : vector<1x16xf32> to vector<8x16xf32>
    %84 = arith.addf %82, %83 : vector<8x16xf32>
    %c0_24 = arith.constant 0 : index
    %c0_25 = arith.constant 0 : index
    %85 = vector.load %arg7[%c0_24, %c0_25] : memref<8x16xf32, #tpu.memory_space<vmem>>, vector<8x16xf32>
    tpu.vector_store %arg7[%c0_24, %c0_25], %84 {strides = array<i32>} : memref<8x16xf32, #tpu.memory_space<vmem>>, vector<8x16xf32>,
    return
  }
  func.func @transform_0(%arg0: i32) -> (i32, i32) {
    %c0_i32 = arith.constant 0 : i32
    %c0_i32_0 = arith.constant 0 : i32
    return %arg0, %c0_i32 : i32, i32
  }
  func.func @transform_1(%arg0: i32) -> (i32, i32) {
    %c0_i32 = arith.constant 0 : i32
    %c0_i32_0 = arith.constant 0 : i32
    return %arg0, %c0_i32 : i32, i32
  }
  func.func @transform_2(%arg0: i32) -> (i32, i32) {
    %c0_i32 = arith.constant 0 : i32
    %c0_i32_0 = arith.constant 0 : i32
    %c0_i32_1 = arith.constant 0 : i32
    return %c0_i32, %c0_i32_0 : i32, i32
  }
  func.func @transform_3(%arg0: i32) -> (i32, i32) {
    %c0_i32 = arith.constant 0 : i32
    %c0_i32_0 = arith.constant 0 : i32
    %c0_i32_1 = arith.constant 0 : i32
    return %c0_i32, %c0_i32_0 : i32, i32
  }
  func.func @transform_4(%arg0: i32) -> (i32, i32) {
    %c0_i32 = arith.constant 0 : i32
    %c0_i32_0 = arith.constant 0 : i32
    %c0_i32_1 = arith.constant 0 : i32
    return %c0_i32, %c0_i32_0 : i32, i32
  }
  func.func @transform_5(%arg0: i32) -> (i32, i32, i32) {
    %c0_i32 = arith.constant 0 : i32
    %c0_i32_0 = arith.constant 0 : i32
    %c0_i32_1 = arith.constant 0 : i32
    %c0_i32_2 = arith.constant 0 : i32
    return %c0_i32, %c0_i32_0, %c0_i32_1 : i32, i32, i32
  }
  func.func @transform_6(%arg0: i32) -> (i32, i32) {
    %c0_i32 = arith.constant 0 : i32
    %c0_i32_0 = arith.constant 0 : i32
    return %arg0, %c0_i32 : i32, i32
  }
}

</mosaic_0001>

<llo_original>
// kernel: mlp_embedding.2
$region0: #{mlp_embedding.2}
  #allocation0 [shape = 'u32[]', space=smem, size = 0x4, offset = 0x4, fixed_abs, tag = 'smem constant byte address 0x4 - core index']
  #allocation1 [shape = 'u32[144,128]{1,0:T(1,128)}', space=vmem, size = 0x12000, scoped, tag = 'internal scratch']
  %s0 = inlined_call_operand.vmem [shape: s32[8,6], index: 0, kind: input, shape index: {}]
  %s1 = inlined_call_operand.vmem [shape: bf16[8,16], index: 1, kind: input, shape index: {}]
  %s2 = inlined_call_operand.hbm [shape: bf16[48,200], index: 2, kind: input, shape index: {}]
  %s3 = inlined_call_operand.vmem [shape: f32[1,1024], index: 3, kind: input, shape index: {}]
  %s4 = inlined_call_operand.vmem [shape: f32[1,2,200], index: 4, kind: output, shape index: {}]
  %s5 = sld [smem:[#allocation0]]
  $region30: #{mlp_embedding.2} parent=0
    _
  %s7 = ssub.s32 1, %s5
  %s8 = scalar_select 0, %s7, %s5
  $region1: #{mlp_embedding.2} parent=0
    #allocation2 [shape = 'u8[24576]{0}', space=vmem, size = 0x6000, scoped, tag = 'input window, operand 2, single buffered']
    #allocation3 [shape = 's32[1]{0}', space=sflag, size = 0x4, scoped, tag = 'scoped memory for mlp_embedding.2']
    %9 = vsyncpa [#allocation3], 0
    // Predicated region
    $region2: #{mlp_embedding.2} parent=1 // pred_check
      _
    $region3: #{mlp_embedding.2} parent=1 // pred_check_branch
      %11 = sbr.rel (0) target = $region5
    $region4: #{mlp_embedding.2} parent=1 // pred_region
      _
    $region5: #{mlp_embedding.2} parent=1 // pred_fallthru
      _
    // Predicated region
    $region6: #{mlp_embedding.2} parent=1 // pred_check
      _
    $region7: #{mlp_embedding.2} parent=1 // pred_check_branch
      %13 = sbr.rel (0) target = $region9
    $region8: #{mlp_embedding.2} parent=1 // pred_region
      _
    $region9: #{mlp_embedding.2} parent=1 // pred_fallthru
      _
    // Predicated region
    $region10: #{mlp_embedding.2} parent=1 // pred_check
      _
    $region11: #{mlp_embedding.2} parent=1 // pred_check_branch
      %15 = sbr.rel (0) target = $region13
    $region12: #{mlp_embedding.2} parent=1 // pred_region
      %s17 = ssub.s32 768, 768
      %18 = vsyncadd [#allocation3], %s17
      %s19 = sshll.u32 [#allocation2], 4
      %s20 = int_to_ptr.vmem [resolvable:$true] %s19
      %25 = dma.hbm_to_vmem [thread:$0]  %s2, 768, %s20, [#allocation3], 128, 128, 8
    $region13: #{mlp_embedding.2} parent=1 // pred_fallthru
      _
    // Predicated region
    $region14: #{mlp_embedding.2} parent=1 // pred_check
      _
    $region15: #{mlp_embedding.2} parent=1 // pred_check_branch
      %27 = sbr.rel (0) target = $region17
    $region16: #{mlp_embedding.2} parent=1 // pred_region
      _
    $region17: #{mlp_embedding.2} parent=1 // pred_fallthru
      _
    // Predicated region
    $region18: #{mlp_embedding.2} parent=1 // pred_check
      _
    $region19: #{mlp_embedding.2} parent=1 // pred_check_branch
      %29 = sbr.rel (0) target = $region21
    $region20: #{mlp_embedding.2} parent=1 // pred_region
      %30 = dma.done [#allocation3], 768
    $region21: #{mlp_embedding.2} parent=1 // pred_fallthru
      _
    %v32 = vld [vmem:[%s0] sm:$0xff]
    %v33 = vlaneseq
    %v34 = vand.u32 %v33, 127
    %35 = vset.pattern.permute.xlu0 0
    %36 = vperm.xlu0 %35, %v32
    %v37 = vpop.permute.xlu0 %36
    %vm38 = vcmp.eq.s32.totalorder %v34, %v37
    %v39 = vadd.s32 %v32, 5
    %40 = vset.pattern.permute.xlu0 1
    %41 = vperm.xlu0 %40, %v39
    %v42 = vpop.permute.xlu0 %41
    %vm43 = vcmp.eq.s32.totalorder %v34, %v42
    %vm44 = vmor %vm38, %vm43
    %v45 = vadd.s32 %v32, 10
    %46 = vset.pattern.permute.xlu0 2
    %47 = vperm.xlu0 %46, %v45
    %v48 = vpop.permute.xlu0 %47
    %vm49 = vcmp.eq.s32.totalorder %v34, %v48
    %vm50 = vmor %vm44, %vm49
    %v51 = vadd.s32 %v32, 15
    %52 = vset.pattern.permute.xlu0 3
    %53 = vperm.xlu0 %52, %v51
    %v54 = vpop.permute.xlu0 %53
    %vm55 = vcmp.eq.s32.totalorder %v34, %v54
    %vm56 = vmor %vm50, %vm55
    %v57 = vadd.s32 %v32, 20
    %58 = vset.pattern.permute.xlu0 4
    %59 = vperm.xlu0 %58, %v57
    %v60 = vpop.permute.xlu0 %59
    %vm61 = vcmp.eq.s32.totalorder %v34, %v60
    %vm62 = vmor %vm56, %vm61
    %v63 = vadd.s32 %v32, 25
    %64 = vset.pattern.permute.xlu0 5
    %65 = vperm.xlu0 %64, %v63
    %v66 = vpop.permute.xlu0 %65
    %vm67 = vcmp.eq.s32.totalorder %v34, %v66
    %vm68 = vmor %vm62, %vm67
    %v69 = vsel %vm68, 1, 0
    %v70 = vcvt.s32.f32 %v69
    %v71 = vpack.c.bf16 %v70, %v70
    %v72 = vld [vmem:[#allocation2] sm:$0xff]
    %v73 = vld [vmem:[#allocation2 + $0x8] sm:$0xff]
    %v74 = vld [vmem:[#allocation2 + $0x10] sm:$0xff]
    %v75 = vld [vmem:[#allocation2 + $0x18] sm:$0xff]
    %v76 = vld [vmem:[#allocation2 + $0x20] sm:$0xff]
    %v77 = vld [vmem:[#allocation2 + $0x28] sm:$0xff]
    %v78 = vld [vmem:[%s3] sm:$0x3]
    %v79 = vld [vmem:[%s1] sm:$0xf]
    %v82 = vunpack.c.l.b16 %v76
    %v83 = vunpack.c.h.b16 %v76
    %v84 = vunpack.c.l.b16 %v77
    %v85 = vunpack.c.h.b16 %v77
    %v86 = vpack.c.b16 %v84, %v82
    %v87 = vpack.c.b16 %v85, %v83
    %vm90 = vcmask 130048
    %v92 = vsel %vm90, %v79, 0
    %94 = vmatprep.subr.bf16.mxu0 0
    %95 = vmatpush1.bf16.msra.mxu0 0
    %96 = vmatprep.subr.bf16.mxu0 0
    %97 = vmatpush1.bf16.msra.mxu0 0
    %98 = vmatprep.subr.bf16.mxu0 0
    %99 = vmatpush1.bf16.msra.mxu0 0
    %100 = vmatprep.subr.bf16.mxu0 0
    %101 = vmatpush1.bf16.msra.mxu0 0
    %102 = vmatprep.subr.bf16.mxu0 0
    %103 = vmatpush1.bf16.msra.mxu0 0
    %104 = vmatprep.subr.bf16.mxu0 0
    %105 = vmatpush1.bf16.msra.mxu0 0
    %106 = vmatprep.subr.bf16.mxu0 0
    %107 = vmatpush1.bf16.msra.mxu0 0
    %108 = vmatprep.subr.bf16.mxu0 %v87
    %109 = vmatpush1.bf16.msra.mxu0 %v86
    %110 = vmatprep.subr.bf16.mxu0 0
    %111 = vmatpush2.bf16.msra.mxu0 0
    %112 = vmatprep.subr.bf16.mxu0 0
    %113 = vmatpush2.bf16.msra.mxu0 0
    %114 = vmatprep.subr.bf16.mxu0 0
    %115 = vmatpush2.bf16.msra.mxu0 0
    %116 = vmatprep.subr.bf16.mxu0 0
    %117 = vmatpush2.bf16.msra.mxu0 0
    %118 = vmatprep.subr.bf16.mxu0 0
    %119 = vmatpush2.bf16.msra.mxu0 0
    %120 = vmatprep.subr.bf16.mxu0 0
    %121 = vmatpush2.bf16.msra.mxu0 0
    %122 = vmatprep.subr.bf16.mxu0 0
    %123 = vmatpush2.bf16.msra.mxu0 0
    %124 = vmatprep.subr.bf16.mxu0 0
    %125 = vmatpush2.bf16.msra.mxu0 0
    %126 = vmatprep.mubr.bf16.mxu0 0
    %127 = vmatmul.mubr.bf16.gmra.mxu0 %v92
    %v128 = vpop.f32.mrf.mxu0
    %v129 = vadd.f32 0.0, %v128
    %v130 = vpop.f32.mrf.mxu0
    %v131 = vadd.f32 0.0, %v130
    %v132 = vpop.f32.mrf.mxu0
    %v133 = vpop.f32.mrf.mxu0
    %134 = vdwg.mxu0
    %v139 = vunpack.c.l.b16 %v72
    %v140 = vunpack.c.h.b16 %v72
    %v141 = vunpack.c.l.b16 %v73
    %v142 = vunpack.c.h.b16 %v73
    %v143 = vunpack.c.l.b16 %v74
    %v144 = vunpack.c.h.b16 %v74
    %v145 = vunpack.c.l.b16 %v75
    %v146 = vunpack.c.h.b16 %v75
    %v147 = vpack.c.b16 %v141, %v139
    %v148 = vpack.c.b16 %v142, %v140
    %v149 = vpack.c.b16 %v145, %v143
    %v150 = vpack.c.b16 %v146, %v144
    %vm155 = vcmask 261120
    %v157 = vsel %vm155, %v71, 0
    %159 = vmatprep.subr.bf16.mxu0 0
    %160 = vmatpush1.bf16.msra.mxu0 0
    %161 = vmatprep.subr.bf16.mxu0 0
    %162 = vmatpush1.bf16.msra.mxu0 0
    %163 = vmatprep.subr.bf16.mxu0 0
    %164 = vmatpush1.bf16.msra.mxu0 0
    %165 = vmatprep.subr.bf16.mxu0 0
    %166 = vmatpush1.bf16.msra.mxu0 0
    %167 = vmatprep.subr.bf16.mxu0 0
    %168 = vmatpush1.bf16.msra.mxu0 0
    %169 = vmatprep.subr.bf16.mxu0 0
    %170 = vmatpush1.bf16.msra.mxu0 0
    %171 = vmatprep.subr.bf16.mxu0 %v150
    %172 = vmatpush1.bf16.msra.mxu0 %v149
    %173 = vmatprep.subr.bf16.mxu0 %v148
    %174 = vmatpush1.bf16.msra.mxu0 %v147
    %175 = vmatprep.subr.bf16.mxu0 0
    %176 = vmatpush2.bf16.msra.mxu0 0
    %177 = vmatprep.subr.bf16.mxu0 0
    %178 = vmatpush2.bf16.msra.mxu0 0
    %179 = vmatprep.subr.bf16.mxu0 0
    %180 = vmatpush2.bf16.msra.mxu0 0
    %181 = vmatprep.subr.bf16.mxu0 0
    %182 = vmatpush2.bf16.msra.mxu0 0
    %183 = vmatprep.subr.bf16.mxu0 0
    %184 = vmatpush2.bf16.msra.mxu0 0
    %185 = vmatprep.subr.bf16.mxu0 0
    %186 = vmatpush2.bf16.msra.mxu0 0
    %187 = vmatprep.subr.bf16.mxu0 0
    %188 = vmatpush2.bf16.msra.mxu0 0
    %189 = vmatprep.subr.bf16.mxu0 0
    %190 = vmatpush2.bf16.msra.mxu0 0
    %191 = vmatprep.mubr.bf16.mxu0 0
    %192 = vmatmul.mubr.bf16.gmra.mxu0 %v157
    %v193 = vpop.f32.mrf.mxu0
    %v194 = vadd.f32 %v129, %v193
    %v195 = vpop.f32.mrf.mxu0
    %v196 = vadd.f32 %v131, %v195
    %v197 = vpop.f32.mrf.mxu0
    %v198 = vpop.f32.mrf.mxu0
    %199 = vdwg.mxu0
    %v201 = vlaneseq
    %v202 = vshrl.u32 %v201, 7
    %v203 = vsub.s32 0, %v202
    %v204 = vrot.slane %v78, %v203
    %v205 = vlaneseq
    %v206 = vshrl.u32 %v205, 7
    %v207 = vsub.s32 1, %v206
    %v208 = vrot.slane %v78, %v207
    %v211 = vadd.f32 %v194, %v204
    %v212 = vadd.f32 %v196, %v208
    %v213 = vlaneseq
    %v214 = vshrl.u32 %v213, 7
    %s215 = smul.u32 0, 8
    %v216 = vstv %s215
    %v217 = vadd.s32 %v214, %v216
    %vm218 = vcmp.lt.s32.totalorder %v217, 8
    %v219 = vsel %vm218, 1, 0
    %v220 = vcvt.s32.f32 %v219
    %v221 = vmul.f32 %v211, %v220
    %v222 = vmul.f32 %v212, %v220
    %v223 = vrot.slane %v221, 4
    %v224 = vadd.f32 %v221, %v223
    %v225 = vrot.slane %v224, 2
    %v226 = vadd.f32 %v224, %v225
    %v227 = vrot.slane %v226, 1
    %v228 = vadd.f32 %v226, %v227
    %vm229 = vcmask 588800
    %v230 = vsel %vm229, %v222, 0.0
    %v231 = vrot.slane %v230, 4
    %v232 = vadd.f32 %v230, %v231
    %v233 = vrot.slane %v232, 2
    %v234 = vadd.f32 %v232, %v233
    %v235 = vrot.slane %v234, 1
    %v236 = vadd.f32 %v234, %v235
    %v237 = vmul.f32 %v211, %v211
    %v238 = vmul.f32 %v212, %v212
    %v239 = vmul.f32 %v237, %v220
    %v240 = vmul.f32 %v238, %v220
    %v241 = vrot.slane %v239, 4
    %v242 = vadd.f32 %v239, %v241
    %v243 = vrot.slane %v242, 2
    %v244 = vadd.f32 %v242, %v243
    %v245 = vrot.slane %v244, 1
    %v246 = vadd.f32 %v244, %v245
    %v247 = vsel %vm229, %v240, 0.0
    %v248 = vrot.slane %v247, 4
    %v249 = vadd.f32 %v247, %v248
    %v250 = vrot.slane %v249, 2
    %v251 = vadd.f32 %v249, %v250
    %v252 = vrot.slane %v251, 1
    %v253 = vadd.f32 %v251, %v252
    %vm254 = vcmp.eq.s32.totalorder %v214, 0
    %v255 = vsel %vm254, %v228, %v246
    %v256 = vsel %vm254, %v236, %v253
    %v259 = vcombine.low %v255, %v256
    %v261 = vunpack.c.l.s4 1983009808
    %v262 = vunpack.c.0.s8 %v261
    %v263 = vlaneseq
    %v264 = vshrl.u32 %v263, 7
    %v265 = vsub.s32 %v262, %v264
    %v266 = vrot.slane %v259, %v265
    %vm268 = vcmask 1041408
    %vm269 = vcmask 584706
    %vm270 = vmor %vm269, %vm268
    %271 = vst.msk [vmem:[%s4] sm:$0xf] %vm270, %v266
    // Predicated region
    $region22: #{mlp_embedding.2} parent=1 // pred_check
      _
    $region23: #{mlp_embedding.2} parent=1 // pred_check_branch
      %273 = sbr.rel (0) target = $region25
    $region24: #{mlp_embedding.2} parent=1 // pred_region
      _
    $region25: #{mlp_embedding.2} parent=1 // pred_fallthru
      _
    // Predicated region
    $region26: #{mlp_embedding.2} parent=1 // pred_check
      _
    $region27: #{mlp_embedding.2} parent=1 // pred_check_branch
      %275 = sbr.rel (0) target = $region29
    $region28: #{mlp_embedding.2} parent=1 // pred_region
      _
    $region29: #{mlp_embedding.2} parent=1 // pred_fallthru
      _
    %276 = vsyncpa [#allocation3], 1

// kernel: mlp_embedding.3
$region0: #{mlp_embedding.3}
  #allocation0 [shape = 'u32[]', space=smem, size = 0x4, offset = 0x4, fixed_abs, tag = 'smem constant byte address 0x4 - core index']
  #allocation1 [shape = 'u32[144,128]{1,0:T(1,128)}', space=vmem, size = 0x12000, scoped, tag = 'internal scratch']
  %s0 = inlined_call_operand.vmem [shape: s32[8,6], index: 0, kind: input, shape index: {}]
  %s1 = inlined_call_operand.vmem [shape: bf16[8,16], index: 1, kind: input, shape index: {}]
  %s2 = inlined_call_operand.vmem [shape: bf16[48,200], index: 2, kind: input, shape index: {}]
  %s3 = inlined_call_operand.vmem [shape: bf16[200,16], index: 3, kind: input, shape index: {}]
  %s4 = inlined_call_operand.vmem [shape: f32[1,1024], index: 4, kind: input, shape index: {}]
  %s5 = inlined_call_operand.vmem [shape: f32[1,2,200], index: 5, kind: input, shape index: {}]
  %s6 = inlined_call_operand.vmem [shape: f32[8,16], index: 6, kind: output, shape index: {}]
  %s7 = sld [smem:[#allocation0]]
  $region34: #{mlp_embedding.3} parent=0
    _
  %s9 = ssub.s32 1, %s7
  %s10 = scalar_select 0, %s9, %s7
  // Predicated region
  $region2: #{mlp_embedding.3} parent=0 // pred_check
    _
  $region3: #{mlp_embedding.3} parent=0 // pred_check_branch
    %12 = sbr.rel (0) target = $region5
  $region4: #{mlp_embedding.3} parent=0 // pred_region
    _
  $region5: #{mlp_embedding.3} parent=0 // pred_fallthru
    _
  // Predicated region
  $region6: #{mlp_embedding.3} parent=0 // pred_check
    _
  $region7: #{mlp_embedding.3} parent=0 // pred_check_branch
    %14 = sbr.rel (0) target = $region9
  $region8: #{mlp_embedding.3} parent=0 // pred_region
    _
  $region9: #{mlp_embedding.3} parent=0 // pred_fallthru
    _
  // Predicated region
  $region10: #{mlp_embedding.3} parent=0 // pred_check
    _
  $region11: #{mlp_embedding.3} parent=0 // pred_check_branch
    %16 = sbr.rel (0) target = $region13
  $region12: #{mlp_embedding.3} parent=0 // pred_region
    _
  $region13: #{mlp_embedding.3} parent=0 // pred_fallthru
    _
  // Predicated region
  $region14: #{mlp_embedding.3} parent=0 // pred_check
    _
  $region15: #{mlp_embedding.3} parent=0 // pred_check_branch
    %18 = sbr.rel (0) target = $region17
  $region16: #{mlp_embedding.3} parent=0 // pred_region
    _
  $region17: #{mlp_embedding.3} parent=0 // pred_fallthru
    _
  // Predicated region
  $region18: #{mlp_embedding.3} parent=0 // pred_check
    _
  $region19: #{mlp_embedding.3} parent=0 // pred_check_branch
    %20 = sbr.rel (0) target = $region21
  $region20: #{mlp_embedding.3} parent=0 // pred_region
    _
  $region21: #{mlp_embedding.3} parent=0 // pred_fallthru
    _
  // Predicated region
  $region22: #{mlp_embedding.3} parent=0 // pred_check
    _
  $region23: #{mlp_embedding.3} parent=0 // pred_check_branch
    %22 = sbr.rel (0) target = $region25
  $region24: #{mlp_embedding.3} parent=0 // pred_region
    _
  $region25: #{mlp_embedding.3} parent=0 // pred_fallthru
    _
  %v24 = vld [vmem:[%s5] sm:$0xf]
  %v25 = vadd.f32 %v24, 0.0
  %v26 = vmul.f32 %v25, 0.125
  %v27 = vmul.f32 %v26, %v26
  %v29 = vrot.slane %v27, 7
  %v31 = vsub.f32 %v26, %v29
  %v32 = vmax.f32 %v31, 0.0
  %v33 = vld [vmem:[%s4 + $0x2] sm:$0x3]
  %v34 = vld [vmem:[%s4 + $0x4] sm:$0x3]
  %v35 = vadd.f32 %v32, 1e-05
  %v36 = vrsqrt.pop %v35
  %v39 = vunpack.c.l.s4 1966171168
  %v40 = vunpack.c.0.s8 %v39
  %v41 = vlaneseq
  %v42 = vshrl.u32 %v41, 7
  %v43 = vsub.s32 %v40, %v42
  %v44 = vrot.slane %v36, %v43
  %v45 = vcombine.high %v44, %v44
  %v47 = vmul.f32 %v33, %v45
  %v50 = vunpack.c.l.s4 857870592
  %v51 = vunpack.c.0.s8 %v50
  %v52 = vlaneseq
  %v53 = vshrl.u32 %v52, 7
  %v54 = vsub.s32 %v51, %v53
  %v55 = vrot.slane %v47, %v54
  %v57 = vmul.f32 %v26, %v55
  %v60 = vunpack.c.l.s4 1966171168
  %v61 = vunpack.c.0.s8 %v60
  %v62 = vlaneseq
  %v63 = vshrl.u32 %v62, 7
  %v64 = vsub.s32 %v61, %v63
  %v65 = vrot.slane %v57, %v64
  %v67 = vsub.f32 %v34, %v65
  %v68 = vld [vmem:[%s0] sm:$0xff]
  %v69 = vlaneseq
  %v70 = vand.u32 %v69, 127
  %71 = vset.pattern.permute.xlu0 0
  %72 = vperm.xlu0 %71, %v68
  %v73 = vpop.permute.xlu0 %72
  %vm74 = vcmp.eq.s32.totalorder %v70, %v73
  %v75 = vadd.s32 %v68, 5
  %76 = vset.pattern.permute.xlu0 1
  %77 = vperm.xlu0 %76, %v75
  %v78 = vpop.permute.xlu0 %77
  %vm79 = vcmp.eq.s32.totalorder %v70, %v78
  %vm80 = vmor %vm74, %vm79
  %v81 = vadd.s32 %v68, 10
  %82 = vset.pattern.permute.xlu0 2
  %83 = vperm.xlu0 %82, %v81
  %v84 = vpop.permute.xlu0 %83
  %vm85 = vcmp.eq.s32.totalorder %v70, %v84
  %vm86 = vmor %vm80, %vm85
  %v87 = vadd.s32 %v68, 15
  %88 = vset.pattern.permute.xlu0 3
  %89 = vperm.xlu0 %88, %v87
  %v90 = vpop.permute.xlu0 %89
  %vm91 = vcmp.eq.s32.totalorder %v70, %v90
  %vm92 = vmor %vm86, %vm91
  %v93 = vadd.s32 %v68, 20
  %94 = vset.pattern.permute.xlu0 4
  %95 = vperm.xlu0 %94, %v93
  %v96 = vpop.permute.xlu0 %95
  %vm97 = vcmp.eq.s32.totalorder %v70, %v96
  %vm98 = vmor %vm92, %vm97
  %v99 = vadd.s32 %v68, 25
  %100 = vset.pattern.permute.xlu0 5
  %101 = vperm.xlu0 %100, %v99
  %v102 = vpop.permute.xlu0 %101
  %vm103 = vcmp.eq.s32.totalorder %v70, %v102
  %vm104 = vmor %vm98, %vm103
  %v105 = vsel %vm104, 1, 0
  %v106 = vcvt.s32.f32 %v105
  %v107 = vpack.c.bf16 %v106, %v106
  %v108 = vld [vmem:[%s2] sm:$0xff]
  %v109 = vld [vmem:[%s2 + $0x8] sm:$0xff]
  %v110 = vld [vmem:[%s2 + $0x10] sm:$0xff]
  %v111 = vld [vmem:[%s2 + $0x18] sm:$0xff]
  %v112 = vld [vmem:[%s2 + $0x20] sm:$0xff]
  %v113 = vld [vmem:[%s2 + $0x28] sm:$0xff]
  %v114 = vld [vmem:[%s4] sm:$0x3]
  %v115 = vld [vmem:[%s1] sm:$0xf]
  %v118 = vunpack.c.l.b16 %v112
  %v119 = vunpack.c.h.b16 %v112
  %v120 = vunpack.c.l.b16 %v113
  %v121 = vunpack.c.h.b16 %v113
  %v122 = vpack.c.b16 %v120, %v118
  %v123 = vpack.c.b16 %v121, %v119
  %vm126 = vcmask 130048
  %v128 = vsel %vm126, %v115, 0
  %130 = vmatprep.subr.bf16.mxu0 0
  %131 = vmatpush1.bf16.msra.mxu0 0
  %132 = vmatprep.subr.bf16.mxu0 0
  %133 = vmatpush1.bf16.msra.mxu0 0
  %134 = vmatprep.subr.bf16.mxu0 0
  %135 = vmatpush1.bf16.msra.mxu0 0
  %136 = vmatprep.subr.bf16.mxu0 0
  %137 = vmatpush1.bf16.msra.mxu0 0
  %138 = vmatprep.subr.bf16.mxu0 0
  %139 = vmatpush1.bf16.msra.mxu0 0
  %140 = vmatprep.subr.bf16.mxu0 0
  %141 = vmatpush1.bf16.msra.mxu0 0
  %142 = vmatprep.subr.bf16.mxu0 0
  %143 = vmatpush1.bf16.msra.mxu0 0
  %144 = vmatprep.subr.bf16.mxu0 %v123
  %145 = vmatpush1.bf16.msra.mxu0 %v122
  %146 = vmatprep.subr.bf16.mxu0 0
  %147 = vmatpush2.bf16.msra.mxu0 0
  %148 = vmatprep.subr.bf16.mxu0 0
  %149 = vmatpush2.bf16.msra.mxu0 0
  %150 = vmatprep.subr.bf16.mxu0 0
  %151 = vmatpush2.bf16.msra.mxu0 0
  %152 = vmatprep.subr.bf16.mxu0 0
  %153 = vmatpush2.bf16.msra.mxu0 0
  %154 = vmatprep.subr.bf16.mxu0 0
  %155 = vmatpush2.bf16.msra.mxu0 0
  %156 = vmatprep.subr.bf16.mxu0 0
  %157 = vmatpush2.bf16.msra.mxu0 0
  %158 = vmatprep.subr.bf16.mxu0 0
  %159 = vmatpush2.bf16.msra.mxu0 0
  %160 = vmatprep.subr.bf16.mxu0 0
  %161 = vmatpush2.bf16.msra.mxu0 0
  %162 = vmatprep.mubr.bf16.mxu0 0
  %163 = vmatmul.mubr.bf16.gmra.mxu0 %v128
  %v164 = vpop.f32.mrf.mxu0
  %v165 = vadd.f32 0.0, %v164
  %v166 = vpop.f32.mrf.mxu0
  %v167 = vadd.f32 0.0, %v166
  %v168 = vpop.f32.mrf.mxu0
  %v169 = vpop.f32.mrf.mxu0
  %170 = vdwg.mxu0
  %v175 = vunpack.c.l.b16 %v108
  %v176 = vunpack.c.h.b16 %v108
  %v177 = vunpack.c.l.b16 %v109
  %v178 = vunpack.c.h.b16 %v109
  %v179 = vunpack.c.l.b16 %v110
  %v180 = vunpack.c.h.b16 %v110
  %v181 = vunpack.c.l.b16 %v111
  %v182 = vunpack.c.h.b16 %v111
  %v183 = vpack.c.b16 %v177, %v175
  %v184 = vpack.c.b16 %v178, %v176
  %v185 = vpack.c.b16 %v181, %v179
  %v186 = vpack.c.b16 %v182, %v180
  %vm191 = vcmask 261120
  %v193 = vsel %vm191, %v107, 0
  %195 = vmatprep.subr.bf16.mxu0 0
  %196 = vmatpush1.bf16.msra.mxu0 0
  %197 = vmatprep.subr.bf16.mxu0 0
  %198 = vmatpush1.bf16.msra.mxu0 0
  %199 = vmatprep.subr.bf16.mxu0 0
  %200 = vmatpush1.bf16.msra.mxu0 0
  %201 = vmatprep.subr.bf16.mxu0 0
  %202 = vmatpush1.bf16.msra.mxu0 0
  %203 = vmatprep.subr.bf16.mxu0 0
  %204 = vmatpush1.bf16.msra.mxu0 0
  %205 = vmatprep.subr.bf16.mxu0 0
  %206 = vmatpush1.bf16.msra.mxu0 0
  %207 = vmatprep.subr.bf16.mxu0 %v186
  %208 = vmatpush1.bf16.msra.mxu0 %v185
  %209 = vmatprep.subr.bf16.mxu0 %v184
  %210 = vmatpush1.bf16.msra.mxu0 %v183
  %211 = vmatprep.subr.bf16.mxu0 0
  %212 = vmatpush2.bf16.msra.mxu0 0
  %213 = vmatprep.subr.bf16.mxu0 0
  %214 = vmatpush2.bf16.msra.mxu0 0
  %215 = vmatprep.subr.bf16.mxu0 0
  %216 = vmatpush2.bf16.msra.mxu0 0
  %217 = vmatprep.subr.bf16.mxu0 0
  %218 = vmatpush2.bf16.msra.mxu0 0
  %219 = vmatprep.subr.bf16.mxu0 0
  %220 = vmatpush2.bf16.msra.mxu0 0
  %221 = vmatprep.subr.bf16.mxu0 0
  %222 = vmatpush2.bf16.msra.mxu0 0
  %223 = vmatprep.subr.bf16.mxu0 0
  %224 = vmatpush2.bf16.msra.mxu0 0
  %225 = vmatprep.subr.bf16.mxu0 0
  %226 = vmatpush2.bf16.msra.mxu0 0
  %227 = vmatprep.mubr.bf16.mxu0 0
  %228 = vmatmul.mubr.bf16.gmra.mxu0 %v193
  %v229 = vpop.f32.mrf.mxu0
  %v230 = vadd.f32 %v165, %v229
  %v231 = vpop.f32.mrf.mxu0
  %v232 = vadd.f32 %v167, %v231
  %v233 = vpop.f32.mrf.mxu0
  %v234 = vpop.f32.mrf.mxu0
  %235 = vdwg.mxu0
  %v237 = vlaneseq
  %v238 = vshrl.u32 %v237, 7
  %v239 = vsub.s32 0, %v238
  %v240 = vrot.slane %v114, %v239
  %v241 = vlaneseq
  %v242 = vshrl.u32 %v241, 7
  %v243 = vsub.s32 1, %v242
  %v244 = vrot.slane %v114, %v243
  %v247 = vadd.f32 %v230, %v240
  %v248 = vadd.f32 %v232, %v244
  %v249 = vlaneseq
  %v250 = vshrl.u32 %v249, 7
  %v251 = vsub.s32 0, %v250
  %v252 = vrot.slane %v47, %v251
  %v253 = vlaneseq
  %v254 = vshrl.u32 %v253, 7
  %v255 = vsub.s32 1, %v254
  %v256 = vrot.slane %v47, %v255
  %v259 = vmul.f32 %v247, %v252
  %v260 = vmul.f32 %v248, %v256
  %v262 = vlaneseq
  %v263 = vshrl.u32 %v262, 7
  %v264 = vsub.s32 0, %v263
  %v265 = vrot.slane %v67, %v264
  %v266 = vlaneseq
  %v267 = vshrl.u32 %v266, 7
  %v268 = vsub.s32 1, %v267
  %v269 = vrot.slane %v67, %v268
  %v272 = vadd.f32 %v259, %v265
  %v273 = vadd.f32 %v260, %v269
  %v274 = vmax.f32 %v272, 0.0
  %v275 = vmax.f32 %v273, 0.0
  %v276 = vld [vmem:[%s4 + $0x6] sm:$0x1]
  %v277 = vpack.c.bf16 %v274, %v274
  %v278 = vpack.c.bf16 %v275, %v275
  %v279 = vld [vmem:[%s3] sm:$0xf]
  %v280 = vld [vmem:[%s3 + $0x4] sm:$0xf]
  %v281 = vld [vmem:[%s3 + $0x8] sm:$0xf]
  %v282 = vld [vmem:[%s3 + $0xc] sm:$0xf]
  %v283 = vld [vmem:[%s3 + $0x10] sm:$0xf]
  %v284 = vld [vmem:[%s3 + $0x14] sm:$0xf]
  %v285 = vld [vmem:[%s3 + $0x18] sm:$0xf]
  %v286 = vld [vmem:[%s3 + $0x1c] sm:$0xf]
  %v287 = vld [vmem:[%s3 + $0x20] sm:$0xf]
  %v288 = vld [vmem:[%s3 + $0x24] sm:$0xf]
  %v289 = vld [vmem:[%s3 + $0x28] sm:$0xf]
  %v290 = vld [vmem:[%s3 + $0x2c] sm:$0xf]
  %v291 = vld [vmem:[%s3 + $0x30] sm:$0xf]
  %v292 = vld [vmem:[%s3 + $0x34] sm:$0xf]
  %v293 = vld [vmem:[%s3 + $0x38] sm:$0xf]
  %v294 = vld [vmem:[%s3 + $0x3c] sm:$0xf]
  %v295 = vld [vmem:[%s3 + $0x40] sm:$0xf]
  %v296 = vld [vmem:[%s3 + $0x44] sm:$0xf]
  %v297 = vld [vmem:[%s3 + $0x48] sm:$0xf]
  %v298 = vld [vmem:[%s3 + $0x4c] sm:$0xf]
  %v299 = vld [vmem:[%s3 + $0x50] sm:$0xf]
  %v300 = vld [vmem:[%s3 + $0x54] sm:$0xf]
  %v301 = vld [vmem:[%s3 + $0x58] sm:$0xf]
  %v302 = vld [vmem:[%s3 + $0x5c] sm:$0xf]
  %v303 = vld [vmem:[%s3 + $0x60] sm:$0xf]
  %v305 = vlaneseq
  %v306 = vshrl.u32 %v305, 7
  %v307 = vsub.s32 0, %v306
  %v308 = vrot.slane %v276, %v307
  %v335 = vunpack.c.l.b16 %v279
  %v336 = vunpack.c.l.b16 %v280
  %v337 = vunpack.c.l.b16 %v281
  %v338 = vunpack.c.l.b16 %v282
  %v339 = vunpack.c.l.b16 %v283
  %v340 = vunpack.c.l.b16 %v284
  %v341 = vunpack.c.l.b16 %v285
  %v342 = vunpack.c.l.b16 %v286
  %v343 = vunpack.c.l.b16 %v287
  %v344 = vunpack.c.l.b16 %v288
  %v345 = vunpack.c.l.b16 %v289
  %v346 = vunpack.c.l.b16 %v290
  %v347 = vunpack.c.l.b16 %v291
  %v348 = vunpack.c.l.b16 %v292
  %v349 = vunpack.c.l.b16 %v293
  %v350 = vunpack.c.l.b16 %v294
  %v351 = vunpack.c.l.b16 %v295
  %v352 = vunpack.c.l.b16 %v296
  %v353 = vunpack.c.l.b16 %v297
  %v354 = vunpack.c.l.b16 %v298
  %v355 = vunpack.c.l.b16 %v299
  %v356 = vunpack.c.l.b16 %v300
  %v357 = vunpack.c.l.b16 %v301
  %v358 = vunpack.c.l.b16 %v302
  %v359 = vunpack.c.l.b16 %v303
  %v360 = vpack.c.b16 %v336, %v335
  %v361 = vpack.c.b16 %v338, %v337
  %v362 = vpack.c.b16 %v340, %v339
  %v363 = vpack.c.b16 %v342, %v341
  %v364 = vpack.c.b16 %v344, %v343
  %v365 = vpack.c.b16 %v346, %v345
  %v366 = vpack.c.b16 %v348, %v347
  %v367 = vpack.c.b16 %v350, %v349
  %v368 = vpack.c.b16 %v352, %v351
  %v369 = vpack.c.b16 %v354, %v353
  %v370 = vpack.c.b16 %v356, %v355
  %v371 = vpack.c.b16 %v358, %v357
  %v372 = vpack.c.b16 %v359, %v359
  %vm385 = vcmask 588800
  %v387 = vsel %vm385, %v278, 0
  %vm389 = vcmask 1043456
  %v391 = vsel %vm389, %v372, 0
  %393 = vmatprep.subr.bf16.mxu0 0
  %394 = vmatpush1.bf16.msra.mxu0 %v367
  %395 = vmatprep.subr.bf16.mxu0 0
  %396 = vmatpush1.bf16.msra.mxu0 %v366
  %397 = vmatprep.subr.bf16.mxu0 0
  %398 = vmatpush1.bf16.msra.mxu0 %v365
  %399 = vmatprep.subr.bf16.mxu0 0
  %400 = vmatpush1.bf16.msra.mxu0 %v364
  %401 = vmatprep.subr.bf16.mxu0 0
  %402 = vmatpush1.bf16.msra.mxu0 %v363
  %403 = vmatprep.subr.bf16.mxu0 0
  %404 = vmatpush1.bf16.msra.mxu0 %v362
  %405 = vmatprep.subr.bf16.mxu0 0
  %406 = vmatpush1.bf16.msra.mxu0 %v361
  %407 = vmatprep.subr.bf16.mxu0 0
  %408 = vmatpush1.bf16.msra.mxu0 %v360
  %409 = vmatprep.subr.bf16.mxu0 0
  %410 = vmatpush2.bf16.msra.mxu0 0
  %411 = vmatprep.subr.bf16.mxu0 0
  %412 = vmatpush2.bf16.msra.mxu0 0
  %413 = vmatprep.subr.bf16.mxu0 0
  %414 = vmatpush2.bf16.msra.mxu0 0
  %415 = vmatprep.subr.bf16.mxu0 0
  %416 = vmatpush2.bf16.msra.mxu0 %v391
  %417 = vmatprep.subr.bf16.mxu0 0
  %418 = vmatpush2.bf16.msra.mxu0 %v371
  %419 = vmatprep.subr.bf16.mxu0 0
  %420 = vmatpush2.bf16.msra.mxu0 %v370
  %421 = vmatprep.subr.bf16.mxu0 0
  %422 = vmatpush2.bf16.msra.mxu0 %v369
  %423 = vmatprep.subr.bf16.mxu0 0
  %424 = vmatpush2.bf16.msra.mxu0 %v368
  %425 = vmatprep.mubr.bf16.mxu0 %v387
  %426 = vmatmul.mubr.bf16.gmra.mxu0 %v277
  %v427 = vpop.f32.mrf.mxu0
  %v428 = vadd.f32 %v308, %v427
  %v429 = vpop.f32.mrf.mxu0
  %v430 = vpop.f32.mrf.mxu0
  %v431 = vpop.f32.mrf.mxu0
  %432 = vdwg.mxu0
  %433 = vst.msk [vmem:[%s6] sm:$0xff] %vm126, %v428
  // Predicated region
  $region26: #{mlp_embedding.3} parent=0 // pred_check
    _
  $region27: #{mlp_embedding.3} parent=0 // pred_check_branch
    %435 = sbr.rel (0) target = $region29
  $region28: #{mlp_embedding.3} parent=0 // pred_region
    _
  $region29: #{mlp_embedding.3} parent=0 // pred_fallthru
    _
  // Predicated region
  $region30: #{mlp_embedding.3} parent=0 // pred_check
    _
  $region31: #{mlp_embedding.3} parent=0 // pred_check_branch
    %437 = sbr.rel (0) target = $region33
  $region32: #{mlp_embedding.3} parent=0 // pred_region
    _
  $region33: #{mlp_embedding.3} parent=0 // pred_fallthru
    _

</llo_original>
